<compile_context>
chip_gen: v7x
topology: tpu7x:2x2x1
jax: 0.10.0
libtpu: 0.0.40
codegen_flags: <defaults>
</compile_context>

<pallas_src>
import functools

import jax
import jax.numpy as jnp
from jax.experimental import pallas as pl
from jax.experimental.pallas import tpu as pltpu

INPLANES = 8          # inplanes == planes so the residual add is shape-valid
PLANES = 8
K2 = 17               # conv2 kernel size
PAD = (K2 - 1) // 2   # conv2 padding = 8
BN_EPS = 1e-5


def basic_block_kernel(x_ref, w1_ref, w2_ref, bias_ref, o_ref, *, L, k2, pad):
    """One grid step over a lane-dense slab of B_TILE samples.

    x_ref    : (Cin, lane_tile) bf16, lane_tile = B_TILE * L (sample-major)
    w1_ref   : (P, Cin)        bf16, BN1 scale folded in
    w2_ref   : (P, k2 * Cin)   f32,  BN2 scale folded in, tap-major rows
    bias_ref : (2, P, 1)       f32,  [bn1 bias, bn2 bias]
    o_ref    : (P, lane_tile)  f32
    """
    lane_tile = x_ref.shape[-1]
    P = w1_ref.shape[0]

    x_bf = x_ref[...]                                                   # (Cin, lane) bf16

    # conv1 (pointwise) + bn1 (scale pre-folded) + relu — bf16 MXU, f32 accumulate.
    h = jnp.dot(w1_ref[...], x_bf, preferred_element_type=jnp.float32)  # (P, lane) f32
    h = jnp.maximum(h + bias_ref[0], 0.0)

    # Per-sample lane position (period L): used to zero conv2 taps that would
    # read across a sample boundary (replaces the zero-padded scratch buffer
    # and its 17 lane-misaligned slice reads).
    lpos = jax.lax.broadcasted_iota(jnp.int32, (P, lane_tile), 1) % L

    # im2col: stack k2 shifted copies of h on the sublane axis.  Shifts run on
    # the XLU via pltpu.roll; wrap-around / cross-sample lanes are masked to 0.
    pieces = []
    for k in range(k2):
        d = k - pad                        # static tap offset in [-pad, pad]
        if d == 0:
            pieces.append(h)
            continue
        shifted = pltpu.roll(h, shift=(-d) % lane_tile, axis=1)   # shifted[l] = h[l + d]
        valid = (lpos < L - d) if d > 0 else (lpos >= -d)
        pieces.append(jnp.where(valid, shifted, 0.0))
    patch = jnp.concatenate(pieces, axis=0)                        # (k2*P, lane) f32

    # conv2 + bn2 scale as ONE contraction-(k2*P = 136) MXU matmul.
    y = jnp.dot(w2_ref[...], patch, preferred_element_type=jnp.float32)  # (P, lane)

    # bn2 bias + residual + final relu (f32 element-wise path).
    out = y + bias_ref[1] + x_bf.astype(jnp.float32)
    o_ref[...] = jnp.maximum(out, 0.0).astype(o_ref.dtype)


def basic_block(x, w1, w2, s1, b1, s2, b2, *, lanes_per_step=8192):
    """x: (N, Cin, L) f32; w1: (P, Cin); w2: (K2, P, Cin) with w2[k,p,c]=W_torch[p,c,k];
    s*/b*: folded eval-mode BatchNorm scale/bias, shape (P,) (or (P,1))."""
    N, Cin, L = x.shape
    P = w1.shape[0]
    k2 = w2.shape[0]
    pad = (k2 - 1) // 2
    assert Cin == P, "residual add requires inplanes == planes (downsample=None)"

    s1 = jnp.asarray(s1).reshape(P)
    b1 = jnp.asarray(b1).reshape(P)
    s2 = jnp.asarray(s2).reshape(P)
    b2 = jnp.asarray(b2).reshape(P)

    # Fold BN scales into the conv weights (free, wrapper-side).
    w1f = (s1[:, None] * w1).astype(jnp.bfloat16)                     # (P, Cin)
    w2s = w2 * s2[None, :, None]                                       # (k2, P, Cin)
    w2f = jnp.transpose(w2s, (1, 0, 2)).reshape(P, k2 * Cin)           # (P, k2*Cin) f32
    bias = jnp.stack([b1, b2]).reshape(2, P, 1).astype(jnp.float32)    # one tiny input

    # Batch tile: many samples per grid step, lane-dense blocks, VMEM-capped.
    if L % 128 == 0:
        b_tile = max(1, min(N, lanes_per_step // L))
        if N > 1:                       # keep >= 2 grid steps for megacore sharding
            b_tile = min(b_tile, (N + 1) // 2)
    else:
        b_tile = N                      # single full-width block (equals full dims)
    n_pad = pl.cdiv(N, b_tile) * b_tile
    xp = x if n_pad == N else jnp.pad(x, ((0, n_pad - N), (0, 0), (0, 0)))

    # (N, C, L) -> (C, N*L): channels on sublanes, fused batch*length on lanes.
    x2d = jnp.transpose(xp, (1, 0, 2)).reshape(Cin, n_pad * L).astype(jnp.bfloat16)

    lane_tile = b_tile * L
    grid = (n_pad // b_tile,)

    kernel = functools.partial(basic_block_kernel, L=L, k2=k2, pad=pad)

    out2d = pl.pallas_call(
        kernel,
        out_shape=jax.ShapeDtypeStruct((P, n_pad * L), jnp.float32),
        grid_spec=pltpu.PrefetchScalarGridSpec(
            num_scalar_prefetch=0,
            grid=grid,
            in_specs=[
                pl.BlockSpec((Cin, lane_tile), lambda i: (0, i)),      # x slab
                pl.BlockSpec((P, Cin), lambda i: (0, 0)),              # conv1 (bf16)
                pl.BlockSpec((P, k2 * Cin), lambda i: (0, 0)),         # conv2 im2col wt
                pl.BlockSpec((2, P, 1), lambda i: (0, 0, 0)),          # bn biases
            ],
            out_specs=pl.BlockSpec((P, lane_tile), lambda i: (0, i)),
        ),
        compiler_params=pltpu.CompilerParams(
            dimension_semantics=("parallel",),
            vmem_limit_bytes=32 * 1024 * 1024),
    )(x2d, w1f, w2f, bias)

    out = out2d.reshape(P, n_pad, L).transpose(1, 0, 2)                # (n_pad, P, L)
    return out[:N]


def reference(x, w1, w2, s1, b1, s2, b2):
    """Pure-JAX reference with the same folding and bf16 input rounding as the kernel."""
    N, C, L = x.shape
    P = w1.shape[0]
    k2 = w2.shape[0]
    pad = (k2 - 1) // 2
    s1 = jnp.asarray(s1).reshape(P); b1 = jnp.asarray(b1).reshape(P)
    s2 = jnp.asarray(s2).reshape(P); b2 = jnp.asarray(b2).reshape(P)
    hi = jax.lax.Precision.HIGHEST

    xr = x.astype(jnp.bfloat16).astype(jnp.float32)
    w1r = (s1[:, None] * w1).astype(jnp.bfloat16).astype(jnp.float32)
    h = jnp.einsum('pc,ncl->npl', w1r, xr, precision=hi) + b1[None, :, None]
    h = jnp.maximum(h, 0.0)
    hp = jnp.pad(h, ((0, 0), (0, 0), (pad, pad)))
    w2s = w2 * s2[None, :, None]
    out = jnp.zeros_like(h)
    for k in range(k2):
        out = out + jnp.einsum('pc,ncl->npl', w2s[k], hp[:, :, k:k + L], precision=hi)
    out = out + b2[None, :, None] + xr
    return jnp.maximum(out, 0.0)


def fold_bn(gamma, beta, mean, var):
    scale = gamma / jnp.sqrt(var + BN_EPS)
    bias = beta - mean * scale
    return scale, bias


if __name__ == "__main__":
    N, C, L = 4, INPLANES, 128
    key = jax.random.PRNGKey(0)
    ks = jax.random.split(key, 11)

    x = jax.random.normal(ks[0], (N, C, L), jnp.float32)

    # conv1 weight: torch shape (planes, inplanes, 1) -> squeeze to (P, Cin)
    w1 = jax.random.normal(ks[1], (PLANES, C), jnp.float32) * 0.2
    # conv2 weight: torch shape (planes, planes, 17) -> (K, P, C) with w2[k,p,c]=W_torch[p,c,k]
    w2 = jax.random.normal(ks[2], (K2, PLANES, PLANES), jnp.float32) * 0.05

    # BatchNorm params (deterministic, inference-mode semantics).
    g1 = 0.5 + jax.random.uniform(ks[3], (PLANES,), jnp.float32)
    be1 = 0.1 * jax.random.normal(ks[4], (PLANES,), jnp.float32)
    m1 = 0.1 * jax.random.normal(ks[5], (PLANES,), jnp.float32)
    v1 = 0.5 + jax.random.uniform(ks[6], (PLANES,), jnp.float32)
    g2 = 0.5 + jax.random.uniform(ks[7], (PLANES,), jnp.float32)
    be2 = 0.1 * jax.random.normal(ks[8], (PLANES,), jnp.float32)
    m2 = 0.1 * jax.random.normal(ks[9], (PLANES,), jnp.float32)
    v2 = 0.5 + jax.random.uniform(ks[10], (PLANES,), jnp.float32)
    # TODO(synk): training-mode BatchNorm (batch statistics) is not implemented;
    # eval-mode (running-stats) semantics are used and folded into scale/bias.
    s1, b1 = fold_bn(g1, be1, m1, v1)
    s2, b2 = fold_bn(g2, be2, m2, v2)

    out = basic_block(x, w1, w2, s1, b1, s2, b2)
    out = jax.block_until_ready(out)

    ref = reference(x, w1, w2, s1, b1, s2, b2)
    assert out.shape == (N, PLANES, L), out.shape
    assert jnp.allclose(out, ref, rtol=1e-2, atol=1e-2), "mismatch vs reference"

    print("KERNEL_OK")
</pallas_src>

<mosaic_0001>
module attributes {stable_mosaic.version = 11 : i64} {
  func.func @basic_block_kernel(%arg0: i32, %arg1: memref<8x256xbf16, #tpu.memory_space<vmem>>, %arg2: memref<8x8xbf16, #tpu.memory_space<vmem>>, %arg3: memref<8x136xf32, #tpu.memory_space<vmem>>, %arg4: memref<2x8x1xf32, #tpu.memory_space<vmem>>, %arg5: memref<8x256xf32, #tpu.memory_space<vmem>>) attributes {dimension_semantics = [#tpu.dimension_semantics<parallel>], iteration_bounds = array<i64: 2>, scalar_prefetch = 0 : i64, scratch_operands = 0 : i64, tpu.core_type = #tpu.core_type<tc>, window_params = [{transform_indices = @transform_0, window_bounds = array<i64: 8, 256>}, {pipeline_mode = #tpu.pipeline_mode<synchronous>, transform_indices = @transform_1, window_bounds = array<i64: 8, 8>}, {pipeline_mode = #tpu.pipeline_mode<synchronous>, transform_indices = @transform_2, window_bounds = array<i64: 8, 136>}, {pipeline_mode = #tpu.pipeline_mode<synchronous>, transform_indices = @transform_3, window_bounds = array<i64: 2, 8, 1>}, {transform_indices = @transform_4, window_bounds = array<i64: 8, 256>}]} {
    %c0 = arith.constant 0 : index
    %c0_0 = arith.constant 0 : index
    %0 = vector.load %arg1[%c0, %c0_0] : memref<8x256xbf16, #tpu.memory_space<vmem>>, vector<8x256xbf16>
    %c0_1 = arith.constant 0 : index
    %c0_2 = arith.constant 0 : index
    %1 = vector.load %arg2[%c0_1, %c0_2] : memref<8x8xbf16, #tpu.memory_space<vmem>>, vector<8x8xbf16>
    %cst = arith.constant dense<0.000000e+00> : vector<8x256xf32>
    %2 = tpu.matmul %1, %0, %cst {dimension_numbers = #tpu.dot_dimension_numbers<[1], [0], [0], [1], [0, 0, 1, 1], [], []>} : vector<8x8xbf16>, vector<8x256xbf16>, vector<8x256xf32> -> vector<8x256xf32>
    %c0_3 = arith.constant 0 : index
    %c0_4 = arith.constant 0 : index
    %c0_5 = arith.constant 0 : index
    %3 = vector.load %arg4[%c0_3, %c0_4, %c0_5] : memref<2x8x1xf32, #tpu.memory_space<vmem>>, vector<1x8x1xf32>
    %4 = vector.shape_cast %3 : vector<1x8x1xf32> to vector<8x1xf32>
    %5 = vector.broadcast %4 : vector<8x1xf32> to vector<8x256xf32>
    %6 = arith.addf %2, %5 : vector<8x256xf32>
    %cst_6 = arith.constant 0.000000e+00 : f32
    %7 = vector.broadcast %cst_6 : f32 to vector<8x256xf32>
    %8 = arith.maximumf %6, %7 : vector<8x256xf32>
    %9 = tpu.iota {dimensions = array<i32: 1>} : vector<8x256xi32>
    %c128_i32 = arith.constant 128 : i32
    %c0_i32 = arith.constant 0 : i32
    %10 = arith.cmpi eq, %c128_i32, %c0_i32 : i32
    %c1_i32 = arith.constant 1 : i32
    %11 = arith.select %10, %c1_i32, %c128_i32 : i32
    %12 = vector.broadcast %11 : i32 to vector<8x256xi32>
    %13 = arith.remsi %9, %12 : vector<8x256xi32>
    %c0_i32_7 = arith.constant 0 : i32
    %14 = vector.broadcast %c0_i32_7 : i32 to vector<8x256xi32>
    %15 = arith.cmpi ne, %13, %14 : vector<8x256xi32>
    %c0_i32_8 = arith.constant 0 : i32
    %16 = vector.broadcast %c0_i32_8 : i32 to vector<8x256xi32>
    %17 = arith.cmpi slt, %13, %16 : vector<8x256xi32>
    %c0_i32_9 = arith.constant 0 : i32
    %18 = arith.cmpi slt, %11, %c0_i32_9 : i32
    %19 = vector.broadcast %18 : i1 to vector<8x256xi1>
    %20 = vector.broadcast %19 : vector<8x256xi1> to vector<8x256xi1>
    %21 = arith.xori %17, %20 : vector<8x256xi1>
    %22 = arith.andi %21, %15 : vector<8x256xi1>
    %23 = vector.broadcast %11 : i32 to vector<8x256xi32>
    %24 = arith.addi %13, %23 : vector<8x256xi32>
    %25 = arith.select %22, %24, %13 : vector<8x256xi1>, vector<8x256xi32>
    %c8_i32 = arith.constant 8 : i32
    %26 = tpu.dynamic_rotate %8 by %c8_i32 dim 1 : vector<8x256xf32>, i32 -> vector<8x256xf32>
    %c8_i32_10 = arith.constant 8 : i32
    %27 = vector.broadcast %c8_i32_10 : i32 to vector<8x256xi32>
    %28 = arith.cmpi sge, %25, %27 : vector<8x256xi32>
    %cst_11 = arith.constant 0.000000e+00 : f32
    %29 = vector.broadcast %cst_11 : f32 to vector<8x256xf32>
    %30 = arith.select %28, %26, %29 : vector<8x256xi1>, vector<8x256xf32>
    %c7_i32 = arith.constant 7 : i32
    %31 = tpu.dynamic_rotate %8 by %c7_i32 dim 1 : vector<8x256xf32>, i32 -> vector<8x256xf32>
    %c7_i32_12 = arith.constant 7 : i32
    %32 = vector.broadcast %c7_i32_12 : i32 to vector<8x256xi32>
    %33 = arith.cmpi sge, %25, %32 : vector<8x256xi32>
    %cst_13 = arith.constant 0.000000e+00 : f32
    %34 = vector.broadcast %cst_13 : f32 to vector<8x256xf32>
    %35 = arith.select %33, %31, %34 : vector<8x256xi1>, vector<8x256xf32>
    %c6_i32 = arith.constant 6 : i32
    %36 = tpu.dynamic_rotate %8 by %c6_i32 dim 1 : vector<8x256xf32>, i32 -> vector<8x256xf32>
    %c6_i32_14 = arith.constant 6 : i32
    %37 = vector.broadcast %c6_i32_14 : i32 to vector<8x256xi32>
    %38 = arith.cmpi sge, %25, %37 : vector<8x256xi32>
    %cst_15 = arith.constant 0.000000e+00 : f32
    %39 = vector.broadcast %cst_15 : f32 to vector<8x256xf32>
    %40 = arith.select %38, %36, %39 : vector<8x256xi1>, vector<8x256xf32>
    %c5_i32 = arith.constant 5 : i32
    %41 = tpu.dynamic_rotate %8 by %c5_i32 dim 1 : vector<8x256xf32>, i32 -> vector<8x256xf32>
    %c5_i32_16 = arith.constant 5 : i32
    %42 = vector.broadcast %c5_i32_16 : i32 to vector<8x256xi32>
    %43 = arith.cmpi sge, %25, %42 : vector<8x256xi32>
    %cst_17 = arith.constant 0.000000e+00 : f32
    %44 = vector.broadcast %cst_17 : f32 to vector<8x256xf32>
    %45 = arith.select %43, %41, %44 : vector<8x256xi1>, vector<8x256xf32>
    %c4_i32 = arith.constant 4 : i32
    %46 = tpu.dynamic_rotate %8 by %c4_i32 dim 1 : vector<8x256xf32>, i32 -> vector<8x256xf32>
    %c4_i32_18 = arith.constant 4 : i32
    %47 = vector.broadcast %c4_i32_18 : i32 to vector<8x256xi32>
    %48 = arith.cmpi sge, %25, %47 : vector<8x256xi32>
    %cst_19 = arith.constant 0.000000e+00 : f32
    %49 = vector.broadcast %cst_19 : f32 to vector<8x256xf32>
    %50 = arith.select %48, %46, %49 : vector<8x256xi1>, vector<8x256xf32>
    %c3_i32 = arith.constant 3 : i32
    %51 = tpu.dynamic_rotate %8 by %c3_i32 dim 1 : vector<8x256xf32>, i32 -> vector<8x256xf32>
    %c3_i32_20 = arith.constant 3 : i32
    %52 = vector.broadcast %c3_i32_20 : i32 to vector<8x256xi32>
    %53 = arith.cmpi sge, %25, %52 : vector<8x256xi32>
    %cst_21 = arith.constant 0.000000e+00 : f32
    %54 = vector.broadcast %cst_21 : f32 to vector<8x256xf32>
    %55 = arith.select %53, %51, %54 : vector<8x256xi1>, vector<8x256xf32>
    %c2_i32 = arith.constant 2 : i32
    %56 = tpu.dynamic_rotate %8 by %c2_i32 dim 1 : vector<8x256xf32>, i32 -> vector<8x256xf32>
    %c2_i32_22 = arith.constant 2 : i32
    %57 = vector.broadcast %c2_i32_22 : i32 to vector<8x256xi32>
    %58 = arith.cmpi sge, %25, %57 : vector<8x256xi32>
    %cst_23 = arith.constant 0.000000e+00 : f32
    %59 = vector.broadcast %cst_23 : f32 to vector<8x256xf32>
    %60 = arith.select %58, %56, %59 : vector<8x256xi1>, vector<8x256xf32>
    %c1_i32_24 = arith.constant 1 : i32
    %61 = tpu.dynamic_rotate %8 by %c1_i32_24 dim 1 : vector<8x256xf32>, i32 -> vector<8x256xf32>
    %c1_i32_25 = arith.constant 1 : i32
    %62 = vector.broadcast %c1_i32_25 : i32 to vector<8x256xi32>
    %63 = arith.cmpi sge, %25, %62 : vector<8x256xi32>
    %cst_26 = arith.constant 0.000000e+00 : f32
    %64 = vector.broadcast %cst_26 : f32 to vector<8x256xf32>
    %65 = arith.select %63, %61, %64 : vector<8x256xi1>, vector<8x256xf32>
    %c255_i32 = arith.constant 255 : i32
    %66 = tpu.dynamic_rotate %8 by %c255_i32 dim 1 : vector<8x256xf32>, i32 -> vector<8x256xf32>
    %c127_i32 = arith.constant 127 : i32
    %67 = vector.broadcast %c127_i32 : i32 to vector<8x256xi32>
    %68 = arith.cmpi slt, %25, %67 : vector<8x256xi32>
    %cst_27 = arith.constant 0.000000e+00 : f32
    %69 = vector.broadcast %cst_27 : f32 to vector<8x256xf32>
    %70 = arith.select %68, %66, %69 : vector<8x256xi1>, vector<8x256xf32>
    %c254_i32 = arith.constant 254 : i32
    %71 = tpu.dynamic_rotate %8 by %c254_i32 dim 1 : vector<8x256xf32>, i32 -> vector<8x256xf32>
    %c126_i32 = arith.constant 126 : i32
    %72 = vector.broadcast %c126_i32 : i32 to vector<8x256xi32>
    %73 = arith.cmpi slt, %25, %72 : vector<8x256xi32>
    %cst_28 = arith.constant 0.000000e+00 : f32
    %74 = vector.broadcast %cst_28 : f32 to vector<8x256xf32>
    %75 = arith.select %73, %71, %74 : vector<8x256xi1>, vector<8x256xf32>
    %c253_i32 = arith.constant 253 : i32
    %76 = tpu.dynamic_rotate %8 by %c253_i32 dim 1 : vector<8x256xf32>, i32 -> vector<8x256xf32>
    %c125_i32 = arith.constant 125 : i32
    %77 = vector.broadcast %c125_i32 : i32 to vector<8x256xi32>
    %78 = arith.cmpi slt, %25, %77 : vector<8x256xi32>
    %cst_29 = arith.constant 0.000000e+00 : f32
    %79 = vector.broadcast %cst_29 : f32 to vector<8x256xf32>
    %80 = arith.select %78, %76, %79 : vector<8x256xi1>, vector<8x256xf32>
    %c252_i32 = arith.constant 252 : i32
    %81 = tpu.dynamic_rotate %8 by %c252_i32 dim 1 : vector<8x256xf32>, i32 -> vector<8x256xf32>
    %c124_i32 = arith.constant 124 : i32
    %82 = vector.broadcast %c124_i32 : i32 to vector<8x256xi32>
    %83 = arith.cmpi slt, %25, %82 : vector<8x256xi32>
    %cst_30 = arith.constant 0.000000e+00 : f32
    %84 = vector.broadcast %cst_30 : f32 to vector<8x256xf32>
    %85 = arith.select %83, %81, %84 : vector<8x256xi1>, vector<8x256xf32>
    %c251_i32 = arith.constant 251 : i32
    %86 = tpu.dynamic_rotate %8 by %c251_i32 dim 1 : vector<8x256xf32>, i32 -> vector<8x256xf32>
    %c123_i32 = arith.constant 123 : i32
    %87 = vector.broadcast %c123_i32 : i32 to vector<8x256xi32>
    %88 = arith.cmpi slt, %25, %87 : vector<8x256xi32>
    %cst_31 = arith.constant 0.000000e+00 : f32
    %89 = vector.broadcast %cst_31 : f32 to vector<8x256xf32>
    %90 = arith.select %88, %86, %89 : vector<8x256xi1>, vector<8x256xf32>
    %c250_i32 = arith.constant 250 : i32
    %91 = tpu.dynamic_rotate %8 by %c250_i32 dim 1 : vector<8x256xf32>, i32 -> vector<8x256xf32>
    %c122_i32 = arith.constant 122 : i32
    %92 = vector.broadcast %c122_i32 : i32 to vector<8x256xi32>
    %93 = arith.cmpi slt, %25, %92 : vector<8x256xi32>
    %cst_32 = arith.constant 0.000000e+00 : f32
    %94 = vector.broadcast %cst_32 : f32 to vector<8x256xf32>
    %95 = arith.select %93, %91, %94 : vector<8x256xi1>, vector<8x256xf32>
    %c249_i32 = arith.constant 249 : i32
    %96 = tpu.dynamic_rotate %8 by %c249_i32 dim 1 : vector<8x256xf32>, i32 -> vector<8x256xf32>
    %c121_i32 = arith.constant 121 : i32
    %97 = vector.broadcast %c121_i32 : i32 to vector<8x256xi32>
    %98 = arith.cmpi slt, %25, %97 : vector<8x256xi32>
    %cst_33 = arith.constant 0.000000e+00 : f32
    %99 = vector.broadcast %cst_33 : f32 to vector<8x256xf32>
    %100 = arith.select %98, %96, %99 : vector<8x256xi1>, vector<8x256xf32>
    %c248_i32 = arith.constant 248 : i32
    %101 = tpu.dynamic_rotate %8 by %c248_i32 dim 1 : vector<8x256xf32>, i32 -> vector<8x256xf32>
    %c120_i32 = arith.constant 120 : i32
    %102 = vector.broadcast %c120_i32 : i32 to vector<8x256xi32>
    %103 = arith.cmpi slt, %25, %102 : vector<8x256xi32>
    %cst_34 = arith.constant 0.000000e+00 : f32
    %104 = vector.broadcast %cst_34 : f32 to vector<8x256xf32>
    %105 = arith.select %103, %101, %104 : vector<8x256xi1>, vector<8x256xf32>
    %106 = tpu.concatenate %30, %35, %40, %45, %50, %55, %60, %65, %8, %70, %75, %80, %85, %90, %95, %100 in 0 : vector<8x256xf32>, vector<8x256xf32>, vector<8x256xf32>, vector<8x256xf32>, vector<8x256xf32>, vector<8x256xf32>, vector<8x256xf32>, vector<8x256xf32>, vector<8x256xf32>, vector<8x256xf32>, vector<8x256xf32>, vector<8x256xf32>, vector<8x256xf32>, vector<8x256xf32>, vector<8x256xf32>, vector<8x256xf32> -> vector<128x256xf32>
    %107 = tpu.concatenate %106, %105 in 0 : vector<128x256xf32>, vector<8x256xf32> -> vector<136x256xf32>
    %c0_35 = arith.constant 0 : index
    %c0_36 = arith.constant 0 : index
    %108 = vector.load %arg3[%c0_35, %c0_36] : memref<8x136xf32, #tpu.memory_space<vmem>>, vector<8x136xf32>
    %cst_37 = arith.constant dense<0.000000e+00> : vector<8x256xf32>
    %109 = tpu.matmul %108, %107, %cst_37 {dimension_numbers = #tpu.dot_dimension_numbers<[1], [0], [0], [1], [0, 0, 1, 1], [], []>} : vector<8x136xf32>, vector<136x256xf32>, vector<8x256xf32> -> vector<8x256xf32>
    %c1 = arith.constant 1 : index
    %c0_38 = arith.constant 0 : index
    %c0_39 = arith.constant 0 : index
    %110 = vector.load %arg4[%c1, %c0_38, %c0_39] : memref<2x8x1xf32, #tpu.memory_space<vmem>>, vector<1x8x1xf32>
    %111 = vector.shape_cast %110 : vector<1x8x1xf32> to vector<8x1xf32>
    %112 = vector.broadcast %111 : vector<8x1xf32> to vector<8x256xf32>
    %113 = arith.addf %109, %112 : vector<8x256xf32>
    %114 = arith.extf %0 : vector<8x256xbf16> to vector<8x256xf32>
    %115 = arith.addf %113, %114 : vector<8x256xf32>
    %cst_40 = arith.constant 0.000000e+00 : f32
    %116 = vector.broadcast %cst_40 : f32 to vector<8x256xf32>
    %117 = arith.maximumf %115, %116 : vector<8x256xf32>
    %c0_41 = arith.constant 0 : index
    %c0_42 = arith.constant 0 : index
    %118 = vector.load %arg5[%c0_41, %c0_42] : memref<8x256xf32, #tpu.memory_space<vmem>>, vector<8x256xf32>
    tpu.vector_store %arg5[%c0_41, %c0_42], %117 {strides = array<i32>} : memref<8x256xf32, #tpu.memory_space<vmem>>, vector<8x256xf32>,
    return
  }
  func.func @transform_0(%arg0: i32) -> (i32, i32) {
    %c0_i32 = arith.constant 0 : i32
    %c0_i32_0 = arith.constant 0 : i32
    return %c0_i32, %arg0 : i32, i32
  }
  func.func @transform_1(%arg0: i32) -> (i32, i32) {
    %c0_i32 = arith.constant 0 : i32
    %c0_i32_0 = arith.constant 0 : i32
    %c0_i32_1 = arith.constant 0 : i32
    return %c0_i32, %c0_i32_0 : i32, i32
  }
  func.func @transform_2(%arg0: i32) -> (i32, i32) {
    %c0_i32 = arith.constant 0 : i32
    %c0_i32_0 = arith.constant 0 : i32
    %c0_i32_1 = arith.constant 0 : i32
    return %c0_i32, %c0_i32_0 : i32, i32
  }
  func.func @transform_3(%arg0: i32) -> (i32, i32, i32) {
    %c0_i32 = arith.constant 0 : i32
    %c0_i32_0 = arith.constant 0 : i32
    %c0_i32_1 = arith.constant 0 : i32
    %c0_i32_2 = arith.constant 0 : i32
    return %c0_i32, %c0_i32_0, %c0_i32_1 : i32, i32, i32
  }
  func.func @transform_4(%arg0: i32) -> (i32, i32) {
    %c0_i32 = arith.constant 0 : i32
    %c0_i32_0 = arith.constant 0 : i32
    return %c0_i32, %arg0 : i32, i32
  }
}

</mosaic_0001>

<llo_original>
// kernel: tpu_custom_call.1
$region0: #{tpu_custom_call.1}
  #allocation0 [shape = 'u32[]', space=smem, size = 0x4, offset = 0x4, fixed_abs, tag = 'smem constant byte address 0x4 - core index']
  #allocation1 [shape = 'u32[144,128]{1,0:T(1,128)}', space=vmem, size = 0x12000, scoped, tag = 'internal scratch']
  %s0 = inlined_call_operand.vmem [shape: bf16[8,512], index: 0, kind: input, shape index: {}]
  %s1 = inlined_call_operand.vmem [shape: bf16[8,8], index: 1, kind: input, shape index: {}]
  %s2 = inlined_call_operand.hbm [shape: f32[8,136], index: 2, kind: input, shape index: {}]
  %s3 = inlined_call_operand.vmem [shape: f32[2,8,1], index: 3, kind: input, shape index: {}]
  %s4 = inlined_call_operand.hbm [shape: f32[8,512], index: 4, kind: output, shape index: {}]
  %s5 = sld [smem:[#allocation0]]
  $region53: #{tpu_custom_call.1} parent=0
    _
  %s7 = ssub.s32 1, %s5
  %s8 = scalar_select 0, %s7, %s5
  $region1: #{tpu_custom_call.1} parent=0
    #allocation2 [shape = 'u8[8192]{0}', space=vmem, size = 0x2000, scoped, tag = 'input window, operand 2, single buffered']
    #allocation3 [shape = 's32[2]{0}', space=sflag, size = 0x8, scoped, tag = 'scoped memory for tpu_custom_call.1']
    #allocation4 [shape = 's32[2]{0}', space=sflag, size = 0x8, scoped, tag = 'scoped memory for tpu_custom_call.1']
    #allocation5 [shape = 'u8[16384]{0}', space=vmem, size = 0x4000, scoped, tag = 'output window, operand 0']
    %9 = vsyncpa [#allocation3], 0
    %10 = vsyncpa [#allocation4], 0
    %s11 = scalar_lea.sflag [#allocation4], 1
    %12 = vsyncpa %s11, 0
    loop: start=0, step=1, limit=4
    $region2: #{tpu_custom_call.1} parent=1 // loop_pre_header
      _
    $region3: #{tpu_custom_call.1} parent=1 // loop_header
      %s14 = sphi 0, %s18
      %p15 = scmp.ge.s32.totalorder %s14, 4
      %s24 = sphi 0, %s26
      %s27 = sphi 0, %s24
      %s28 = sphi 0, %s27
      %s44 = sphi 0, %s28
      %s48 = sphi 0, %s48
      %s50 = sphi 0, %s48
      %s51 = sphi 0, %s50
      %s65 = sphi 0, %s51
      %s69 = sphi 0, %s69
      %s71 = sphi 0, %s69
      %s72 = sphi 0, %s71
      %s86 = sphi 0, %s72
      %s90 = sphi 0, %s90
      %s92 = sphi 0, %s90
      %s93 = sphi 0, %s92
      %s107 = sphi 0, %s93
      %s113 = sphi 0, %s115
      %s116 = sphi 0, %s113
      %s117 = sphi 0, %s116
      %s133 = sphi 0, %s117
    $region4: #{tpu_custom_call.1} parent=1 // loop_header_branch
      %17 = sbr.rel (%p15) target = $region8
    $region5: #{tpu_custom_call.1} parent=1 // loop_body
      %s19 = ssub.s32 %s14, 1
      %s20 = ssub.s32 %s14, 2
      %s21 = sadd.s32 %s14, 1
      %s22 = ssub.s32 %s14, %s21
      %p23 = scmp.eq.s32.totalorder %s22, 0
      %s25 = sadd.s32 %s24, 1
      %s26 = scalar_select %p23, %s24, %s25
      %p29 = pneg %p23
      %p30 = scmp.eq.s32.totalorder %s14, 1
      %p31 = por %p29, %p30
      %p32 = scmp.ne.s32.totalorder %s24, %s27
      %p33 = scmp.eq.s32.totalorder %s14, 0
      %p34 = por %p32, %p33
      %p35 = scmp.ne.s32.totalorder %s24, %s27
      %p36 = scmp.eq.s32.totalorder %s19, 1
      %p37 = por %p35, %p36
      %p38 = scmp.ne.s32.totalorder %s27, %s28
      %p39 = scmp.eq.s32.totalorder %s19, 0
      %p40 = por %p38, %p39
      %p41 = scmp.ne.s32.totalorder %s27, %s28
      %p42 = scmp.eq.s32.totalorder %s20, 1
      %p43 = por %p41, %p42
      %p45 = scmp.ne.s32.totalorder %s28, %s44
      %p46 = scmp.eq.s32.totalorder %s20, 0
      %p47 = por %p45, %p46
      %s49 = sadd.s32 %s48, 1
      %p52 = scmp.eq.s32.totalorder %s14, 1
      %p53 = scmp.ne.s32.totalorder %s48, %s50
      %p54 = scmp.eq.s32.totalorder %s14, 0
      %p55 = por %p53, %p54
      %p56 = scmp.ne.s32.totalorder %s48, %s50
      %p57 = scmp.eq.s32.totalorder %s19, 1
      %p58 = por %p56, %p57
      %p59 = scmp.ne.s32.totalorder %s50, %s51
      %p60 = scmp.eq.s32.totalorder %s19, 0
      %p61 = por %p59, %p60
      %p62 = scmp.ne.s32.totalorder %s50, %s51
      %p63 = scmp.eq.s32.totalorder %s20, 1
      %p64 = por %p62, %p63
      %p66 = scmp.ne.s32.totalorder %s51, %s65
      %p67 = scmp.eq.s32.totalorder %s20, 0
      %p68 = por %p66, %p67
      %s70 = sadd.s32 %s69, 1
      %p73 = scmp.eq.s32.totalorder %s14, 1
      %p74 = scmp.ne.s32.totalorder %s69, %s71
      %p75 = scmp.eq.s32.totalorder %s14, 0
      %p76 = por %p74, %p75
      %p77 = scmp.ne.s32.totalorder %s69, %s71
      %p78 = scmp.eq.s32.totalorder %s19, 1
      %p79 = por %p77, %p78
      %p80 = scmp.ne.s32.totalorder %s71, %s72
      %p81 = scmp.eq.s32.totalorder %s19, 0
      %p82 = por %p80, %p81
      %p83 = scmp.ne.s32.totalorder %s71, %s72
      %p84 = scmp.eq.s32.totalorder %s20, 1
      %p85 = por %p83, %p84
      %p87 = scmp.ne.s32.totalorder %s72, %s86
      %p88 = scmp.eq.s32.totalorder %s20, 0
      %p89 = por %p87, %p88
      %s91 = sadd.s32 %s90, 1
      %p94 = scmp.eq.s32.totalorder %s14, 1
      %p95 = scmp.ne.s32.totalorder %s90, %s92
      %p96 = scmp.eq.s32.totalorder %s14, 0
      %p97 = por %p95, %p96
      %p98 = scmp.ne.s32.totalorder %s90, %s92
      %p99 = scmp.eq.s32.totalorder %s19, 1
      %p100 = por %p98, %p99
      %p101 = scmp.ne.s32.totalorder %s92, %s93
      %p102 = scmp.eq.s32.totalorder %s19, 0
      %p103 = por %p101, %p102
      %p104 = scmp.ne.s32.totalorder %s92, %s93
      %p105 = scmp.eq.s32.totalorder %s20, 1
      %p106 = por %p104, %p105
      %p108 = scmp.ne.s32.totalorder %s93, %s107
      %p109 = scmp.eq.s32.totalorder %s20, 0
      %p110 = por %p108, %p109
      %s111 = ssub.s32 %s14, %s21
      %p112 = scmp.eq.s32.totalorder %s111, 0
      %s114 = sadd.s32 %s113, 1
      %s115 = scalar_select %p112, %s113, %s114
      %p118 = pneg %p112
      %p119 = scmp.eq.s32.totalorder %s14, 1
      %p120 = por %p118, %p119
      %p121 = scmp.ne.s32.totalorder %s113, %s116
      %p122 = scmp.eq.s32.totalorder %s14, 0
      %p123 = por %p121, %p122
      %p124 = scmp.ne.s32.totalorder %s113, %s116
      %p125 = scmp.eq.s32.totalorder %s19, 1
      %p126 = por %p124, %p125
      %p127 = scmp.ne.s32.totalorder %s116, %s117
      %p128 = scmp.eq.s32.totalorder %s19, 0
      %p129 = por %p127, %p128
      %p130 = scmp.ne.s32.totalorder %s116, %s117
      %p131 = scmp.eq.s32.totalorder %s20, 1
      %p132 = por %p130, %p131
      %p134 = scmp.ne.s32.totalorder %s117, %s133
      %p135 = scmp.eq.s32.totalorder %s20, 0
      %p136 = por %p134, %p135
      %p137 = scmp.le.s32.totalorder 1, %s14
      %p138 = scmp.lt.s32.totalorder %s14, 3
      %p139 = pnand %p137, %p138
      %p140 = pneg %p139
      // Predicated region
      $region9: #{tpu_custom_call.1} parent=5 // pred_check
        _
      $region10: #{tpu_custom_call.1} parent=5 // pred_check_branch
        %142 = sbr.rel (%p139) target = $region12
      $region11: #{tpu_custom_call.1} parent=5 // pred_region
        %s143 = ssub.s32 %s14, 1
        // Predicated region
        $region13: #{tpu_custom_call.1} parent=11 // pred_check
          %p144 = pneg %p61
        $region14: #{tpu_custom_call.1} parent=11 // pred_check_branch
          %146 = sbr.rel (%p144) target = $region16
        $region15: #{tpu_custom_call.1} parent=11 // pred_region
          _
        $region16: #{tpu_custom_call.1} parent=11 // pred_fallthru
          _
        // Predicated region
        $region17: #{tpu_custom_call.1} parent=11 // pred_check
          %p147 = pneg %p82
        $region18: #{tpu_custom_call.1} parent=11 // pred_check_branch
          %149 = sbr.rel (%p147) target = $region20
        $region19: #{tpu_custom_call.1} parent=11 // pred_region
          %s151 = ssub.s32 256, 256
          %152 = vsyncadd [#allocation3], %s151
          %s154 = sshll.u32 [#allocation2], 4
          %s155 = int_to_ptr.vmem [resolvable:$true] %s154
          %157 = dma.hbm_to_vmem [thread:$0]  %s2, 256, %s155, [#allocation3]
        $region20: #{tpu_custom_call.1} parent=11 // pred_fallthru
          _
        // Predicated region
        $region21: #{tpu_custom_call.1} parent=11 // pred_check
          %p158 = pneg %p103
        $region22: #{tpu_custom_call.1} parent=11 // pred_check_branch
          %160 = sbr.rel (%p158) target = $region24
        $region23: #{tpu_custom_call.1} parent=11 // pred_region
          _
        $region24: #{tpu_custom_call.1} parent=11 // pred_fallthru
          _
      $region12: #{tpu_custom_call.1} parent=5 // pred_fallthru
        _
      %p161 = scmp.lt.s32.totalorder %s14, 2
      // Predicated region
      $region25: #{tpu_custom_call.1} parent=5 // pred_check
        %p162 = pneg %p161
      $region26: #{tpu_custom_call.1} parent=5 // pred_check_branch
        %164 = sbr.rel (%p162) target = $region28
      $region27: #{tpu_custom_call.1} parent=5 // pred_region
        // Predicated region
        $region29: #{tpu_custom_call.1} parent=27 // pred_check
          %p165 = pneg %p34
        $region30: #{tpu_custom_call.1} parent=27 // pred_check_branch
          %167 = sbr.rel (%p165) target = $region32
        $region31: #{tpu_custom_call.1} parent=27 // pred_region
          %s168 = smul.u32 2, %s14
          %p169 = scmp.lt.s32.totalorder %s168, 3
          %s170 = scalar_select %p169, %s168, 3
          %s171 = smul.addr %s170, 4
          %s172 = scalar_lea.vmem %s0, %s171
          %s173 = smul.u32 2, %s14
        $region32: #{tpu_custom_call.1} parent=27 // pred_fallthru
          _
      $region28: #{tpu_custom_call.1} parent=5 // pred_fallthru
        _
      %p174 = scmp.le.s32.totalorder 1, %s14
      %p175 = scmp.lt.s32.totalorder %s14, 3
      %p176 = pnand %p174, %p175
      %p177 = pneg %p176
      // Predicated region
      $region33: #{tpu_custom_call.1} parent=5 // pred_check
        _
      $region34: #{tpu_custom_call.1} parent=5 // pred_check_branch
        %179 = sbr.rel (%p176) target = $region36
      $region35: #{tpu_custom_call.1} parent=5 // pred_region
        %s180 = ssub.s32 %s14, 1
        // Predicated region
        $region37: #{tpu_custom_call.1} parent=35 // pred_check
          %p181 = pneg %p82
        $region38: #{tpu_custom_call.1} parent=35 // pred_check_branch
          %183 = sbr.rel (%p181) target = $region40
        $region39: #{tpu_custom_call.1} parent=35 // pred_region
          %184 = dma.done [#allocation3], 256
        $region40: #{tpu_custom_call.1} parent=35 // pred_fallthru
          _
        %s185 = smul.u32 2, %s19
        %p186 = scmp.lt.s32.totalorder %s185, 3
        %s187 = scalar_select %p186, %s185, 3
        %s188 = smul.addr %s187, 4
        %s189 = scalar_lea.vmem %s0, %s188
        %p190 = pneg %p40
        %p191 = pneg %p37
        %p192 = pneg %p61
        %p193 = pneg %p58
        %p194 = pneg %p82
        %p195 = pneg %p79
        %p196 = pneg %p103
        %p197 = pneg %p100
        %p198 = pneg %p129
        %p199 = pneg %p126
        %s200 = sand.u32 %s116, 1
        %s201 = scalar_lea.sflag [#allocation4], %s200
        %s202 = sand.u32 %s116, 1
        %s203 = smul.addr %s202, 16
        %s204 = scalar_lea.vmem [#allocation5], %s203
        %s205 = smul.u32 2, %s19
        %p206 = scmp.lt.s32.totalorder %s205, 3
        %s207 = scalar_select %p206, %s205, 3
        %s208 = smul.addr %s207, 4
        %s209 = scalar_lea.vmem %s0, %s208
        %s210 = smul.u32 2, %s19
        %s211 = smul.u32 2, %s19
        %v213 = vld [vmem:[%s209] sm:$0xff]
        %v214 = vld [vmem:[%s1] sm:$0xf]
        %v215 = vld [vmem:[%s3] sm:$0xff]
        %217 = vset.pattern.permute.xlu0 0
        %218 = vperm.xlu0 %217, %v215
        %v219 = vpop.permute.xlu0 %218
        %v222 = vunpack.c.l.b16 %v213
        %v223 = vunpack.c.h.b16 %v213
        %v224 = vpack.c.b16 %v222, %v222
        %v225 = vpack.c.b16 %v223, %v223
        %vm226 = vcmask 64512
        %v228 = vsel %vm226, %v214, 0
        %vm230 = vcmask 1043456
        %v232 = vsel %vm230, %v224, 0
        %v235 = vsel %vm230, %v225, 0
        %237 = vmatprep.subr.bf16.mxu0 %v235
        %238 = vmatpush1.bf16.msra.mxu0 %v232
        %239 = vmatprep.subr.bf16.mxu0 0
        %240 = vmatpush1.bf16.msra.mxu0 0
        %241 = vmatprep.subr.bf16.mxu0 0
        %242 = vmatpush1.bf16.msra.mxu0 0
        %243 = vmatprep.subr.bf16.mxu0 0
        %244 = vmatpush1.bf16.msra.mxu0 0
        %245 = vmatprep.subr.bf16.mxu0 0
        %246 = vmatpush1.bf16.msra.mxu0 0
        %247 = vmatprep.subr.bf16.mxu0 0
        %248 = vmatpush1.bf16.msra.mxu0 0
        %249 = vmatprep.subr.bf16.mxu0 0
        %250 = vmatpush1.bf16.msra.mxu0 0
        %251 = vmatprep.subr.bf16.mxu0 0
        %252 = vmatpush1.bf16.msra.mxu0 0
        %253 = vmatprep.subr.bf16.mxu0 0
        %254 = vmatpush1.bf16.msra.mxu0 0
        %255 = vmatprep.subr.bf16.mxu0 0
        %256 = vmatpush1.bf16.msra.mxu0 0
        %257 = vmatprep.subr.bf16.mxu0 0
        %258 = vmatpush1.bf16.msra.mxu0 0
        %259 = vmatprep.subr.bf16.mxu0 0
        %260 = vmatpush1.bf16.msra.mxu0 0
        %261 = vmatprep.subr.bf16.mxu0 0
        %262 = vmatpush1.bf16.msra.mxu0 0
        %263 = vmatprep.subr.bf16.mxu0 0
        %264 = vmatpush1.bf16.msra.mxu0 0
        %265 = vmatprep.subr.bf16.mxu0 0
        %266 = vmatpush1.bf16.msra.mxu0 0
        %267 = vmatprep.subr.bf16.mxu0 0
        %268 = vmatpush1.bf16.msra.mxu0 0
        %269 = vmatprep.mubr.bf16.mxu0 0
        %270 = vmatmul.mubr.bf16.gmra.mrb[0].mxu0 %v228
        %v271 = vpop.f32.mrb[0].mxu0
        %v272 = vadd.f32 %v219, %v271
        %v273 = vpop.f32.mrb[0].mxu0
        %v274 = vadd.f32 %v219, %v273
        %v275 = vpop.f32.mrb[0].mxu0
        %v276 = vpop.f32.mrb[0].mxu0
        %277 = vdwg.mxu0
        %v278 = vmax.f32 %v272, 0.0
        %v279 = vmax.f32 %v274, 0.0
        %v280 = vlaneseq
        %v281 = vand.u32 %v280, 127
        %v282 = vadd.s32 %v281, 128
        %vm283 = vcmp.lt.s32.totalorder %v281, 0
        %v284 = vsub.s32 0, %v281
        %v285 = vsel %vm283, %v284, %v281
        %v286 = vshrl.u32 %v285, 7
        %v287 = vand.u32 %v285, 127
        %v288 = vsub.s32 0, %v287
        %v289 = vsel %vm283, %v288, %v287
        %vm290 = vcmp.lt.s32.totalorder %v282, 0
        %v291 = vsub.s32 0, %v282
        %v292 = vsel %vm290, %v291, %v282
        %v293 = vshrl.u32 %v292, 7
        %v294 = vand.u32 %v292, 127
        %v295 = vsub.s32 0, %v294
        %v296 = vsel %vm290, %v295, %v294
        %vm297 = vcmp.ne.s32.totalorder %v289, 0
        %vm298 = vcmp.ne.s32.totalorder %v296, 0
        %vm299 = vcmp.lt.s32.totalorder %v289, 0
        %vm300 = vcmp.lt.s32.totalorder %v296, 0
        %vm301 = vmand %vm299, %vm297
        %vm302 = vmand %vm300, %vm298
        %v303 = vadd.s32 %v289, 128
        %v304 = vadd.s32 %v296, 128
        %v305 = vsel %vm301, %v303, %v289
        %v306 = vsel %vm302, %v304, %v296
        %307 = vrot.lane.b32.xlu0 %v278, 8
        %v308 = vpop.permute.xlu0 %307
        %309 = vrot.lane.b32.xlu0 %v279, 8
        %v310 = vpop.permute.xlu0 %309
        %vm311 = vcmp.lt.s32.totalorder %v281, 8
        %v312 = vsel %vm311, %v308, %v310
        %v313 = vsel %vm311, %v310, %v308
        %vm314 = vcmp.ge.s32.totalorder %v305, 8
        %vm315 = vcmp.ge.s32.totalorder %v306, 8
        %v316 = vsel %vm314, %v313, 0.0
        %v317 = vsel %vm315, %v312, 0.0
        %318 = vrot.lane.b32.xlu0 %v278, 7
        %v319 = vpop.permute.xlu0 %318
        %320 = vrot.lane.b32.xlu0 %v279, 7
        %v321 = vpop.permute.xlu0 %320
        %vm322 = vcmp.lt.s32.totalorder %v281, 7
        %v323 = vsel %vm322, %v319, %v321
        %v324 = vsel %vm322, %v321, %v319
        %vm325 = vcmp.ge.s32.totalorder %v305, 7
        %vm326 = vcmp.ge.s32.totalorder %v306, 7
        %v327 = vsel %vm325, %v324, 0.0
        %v328 = vsel %vm326, %v323, 0.0
        %329 = vrot.lane.b32.xlu0 %v278, 6
        %v330 = vpop.permute.xlu0 %329
        %331 = vrot.lane.b32.xlu0 %v279, 6
        %v332 = vpop.permute.xlu0 %331
        %vm333 = vcmp.lt.s32.totalorder %v281, 6
        %v334 = vsel %vm333, %v330, %v332
        %v335 = vsel %vm333, %v332, %v330
        %vm336 = vcmp.ge.s32.totalorder %v305, 6
        %vm337 = vcmp.ge.s32.totalorder %v306, 6
        %v338 = vsel %vm336, %v335, 0.0
        %v339 = vsel %vm337, %v334, 0.0
        %340 = vrot.lane.b32.xlu0 %v278, 5
        %v341 = vpop.permute.xlu0 %340
        %342 = vrot.lane.b32.xlu0 %v279, 5
        %v343 = vpop.permute.xlu0 %342
        %vm344 = vcmp.lt.s32.totalorder %v281, 5
        %v345 = vsel %vm344, %v341, %v343
        %v346 = vsel %vm344, %v343, %v341
        %vm347 = vcmp.ge.s32.totalorder %v305, 5
        %vm348 = vcmp.ge.s32.totalorder %v306, 5
        %v349 = vsel %vm347, %v346, 0.0
        %v350 = vsel %vm348, %v345, 0.0
        %351 = vrot.lane.b32.xlu0 %v278, 4
        %v352 = vpop.permute.xlu0 %351
        %353 = vrot.lane.b32.xlu0 %v279, 4
        %v354 = vpop.permute.xlu0 %353
        %vm355 = vcmp.lt.s32.totalorder %v281, 4
        %v356 = vsel %vm355, %v352, %v354
        %v357 = vsel %vm355, %v354, %v352
        %vm358 = vcmp.ge.s32.totalorder %v305, 4
        %vm359 = vcmp.ge.s32.totalorder %v306, 4
        %v360 = vsel %vm358, %v357, 0.0
        %v361 = vsel %vm359, %v356, 0.0
        %362 = vrot.lane.b32.xlu0 %v278, 3
        %v363 = vpop.permute.xlu0 %362
        %364 = vrot.lane.b32.xlu0 %v279, 3
        %v365 = vpop.permute.xlu0 %364
        %vm366 = vcmp.lt.s32.totalorder %v281, 3
        %v367 = vsel %vm366, %v363, %v365
        %v368 = vsel %vm366, %v365, %v363
        %vm369 = vcmp.ge.s32.totalorder %v305, 3
        %vm370 = vcmp.ge.s32.totalorder %v306, 3
        %v371 = vsel %vm369, %v368, 0.0
        %v372 = vsel %vm370, %v367, 0.0
        %373 = vrot.lane.b32.xlu0 %v278, 2
        %v374 = vpop.permute.xlu0 %373
        %375 = vrot.lane.b32.xlu0 %v279, 2
        %v376 = vpop.permute.xlu0 %375
        %vm377 = vcmp.lt.s32.totalorder %v281, 2
        %v378 = vsel %vm377, %v374, %v376
        %v379 = vsel %vm377, %v376, %v374
        %vm380 = vcmp.ge.s32.totalorder %v305, 2
        %vm381 = vcmp.ge.s32.totalorder %v306, 2
        %v382 = vsel %vm380, %v379, 0.0
        %v383 = vsel %vm381, %v378, 0.0
        %384 = vrot.lane.b32.xlu0 %v278, 1
        %v385 = vpop.permute.xlu0 %384
        %386 = vrot.lane.b32.xlu0 %v279, 1
        %v387 = vpop.permute.xlu0 %386
        %vm388 = vcmp.lt.s32.totalorder %v281, 1
        %v389 = vsel %vm388, %v385, %v387
        %v390 = vsel %vm388, %v387, %v385
        %vm391 = vcmp.ge.s32.totalorder %v305, 1
        %vm392 = vcmp.ge.s32.totalorder %v306, 1
        %v393 = vsel %vm391, %v390, 0.0
        %v394 = vsel %vm392, %v389, 0.0
        %395 = vrot.lane.b32.xlu0 %v278, 127
        %v396 = vpop.permute.xlu0 %395
        %397 = vrot.lane.b32.xlu0 %v279, 127
        %v398 = vpop.permute.xlu0 %397
        %vm399 = vcmp.lt.s32.totalorder %v281, 127
        %v400 = vsel %vm399, %v396, %v398
        %v401 = vsel %vm399, %v398, %v396
        %vm402 = vcmp.lt.s32.totalorder %v305, 127
        %vm403 = vcmp.lt.s32.totalorder %v306, 127
        %v404 = vsel %vm402, %v400, 0.0
        %v405 = vsel %vm403, %v401, 0.0
        %406 = vrot.lane.b32.xlu0 %v278, 126
        %v407 = vpop.permute.xlu0 %406
        %408 = vrot.lane.b32.xlu0 %v279, 126
        %v409 = vpop.permute.xlu0 %408
        %vm410 = vcmp.lt.s32.totalorder %v281, 126
        %v411 = vsel %vm410, %v407, %v409
        %v412 = vsel %vm410, %v409, %v407
        %vm413 = vcmp.lt.s32.totalorder %v305, 126
        %vm414 = vcmp.lt.s32.totalorder %v306, 126
        %v415 = vsel %vm413, %v411, 0.0
        %v416 = vsel %vm414, %v412, 0.0
        %417 = vrot.lane.b32.xlu0 %v278, 125
        %v418 = vpop.permute.xlu0 %417
        %419 = vrot.lane.b32.xlu0 %v279, 125
        %v420 = vpop.permute.xlu0 %419
        %vm421 = vcmp.lt.s32.totalorder %v281, 125
        %v422 = vsel %vm421, %v418, %v420
        %v423 = vsel %vm421, %v420, %v418
        %vm424 = vcmp.lt.s32.totalorder %v305, 125
        %vm425 = vcmp.lt.s32.totalorder %v306, 125
        %v426 = vsel %vm424, %v422, 0.0
        %v427 = vsel %vm425, %v423, 0.0
        %428 = vrot.lane.b32.xlu0 %v278, 124
        %v429 = vpop.permute.xlu0 %428
        %430 = vrot.lane.b32.xlu0 %v279, 124
        %v431 = vpop.permute.xlu0 %430
        %vm432 = vcmp.lt.s32.totalorder %v281, 124
        %v433 = vsel %vm432, %v429, %v431
        %v434 = vsel %vm432, %v431, %v429
        %vm435 = vcmp.lt.s32.totalorder %v305, 124
        %vm436 = vcmp.lt.s32.totalorder %v306, 124
        %v437 = vsel %vm435, %v433, 0.0
        %v438 = vsel %vm436, %v434, 0.0
        %439 = vrot.lane.b32.xlu0 %v278, 123
        %v440 = vpop.permute.xlu0 %439
        %441 = vrot.lane.b32.xlu0 %v279, 123
        %v442 = vpop.permute.xlu0 %441
        %vm443 = vcmp.lt.s32.totalorder %v281, 123
        %v444 = vsel %vm443, %v440, %v442
        %v445 = vsel %vm443, %v442, %v440
        %vm446 = vcmp.lt.s32.totalorder %v305, 123
        %vm447 = vcmp.lt.s32.totalorder %v306, 123
        %v448 = vsel %vm446, %v444, 0.0
        %v449 = vsel %vm447, %v445, 0.0
        %450 = vrot.lane.b32.xlu0 %v278, 122
        %v451 = vpop.permute.xlu0 %450
        %452 = vrot.lane.b32.xlu0 %v279, 122
        %v453 = vpop.permute.xlu0 %452
        %vm454 = vcmp.lt.s32.totalorder %v281, 122
        %v455 = vsel %vm454, %v451, %v453
        %v456 = vsel %vm454, %v453, %v451
        %vm457 = vcmp.lt.s32.totalorder %v305, 122
        %vm458 = vcmp.lt.s32.totalorder %v306, 122
        %v459 = vsel %vm457, %v455, 0.0
        %v460 = vsel %vm458, %v456, 0.0
        %461 = vrot.lane.b32.xlu0 %v278, 121
        %v462 = vpop.permute.xlu0 %461
        %463 = vrot.lane.b32.xlu0 %v279, 121
        %v464 = vpop.permute.xlu0 %463
        %vm465 = vcmp.lt.s32.totalorder %v281, 121
        %v466 = vsel %vm465, %v462, %v464
        %v467 = vsel %vm465, %v464, %v462
        %vm468 = vcmp.lt.s32.totalorder %v305, 121
        %vm469 = vcmp.lt.s32.totalorder %v306, 121
        %v470 = vsel %vm468, %v466, 0.0
        %v471 = vsel %vm469, %v467, 0.0
        %472 = vrot.lane.b32.xlu0 %v278, 120
        %v473 = vpop.permute.xlu0 %472
        %474 = vrot.lane.b32.xlu0 %v279, 120
        %v475 = vpop.permute.xlu0 %474
        %vm476 = vcmp.lt.s32.totalorder %v281, 120
        %v477 = vsel %vm476, %v473, %v475
        %v478 = vsel %vm476, %v475, %v473
        %vm479 = vcmp.lt.s32.totalorder %v305, 120
        %vm480 = vcmp.lt.s32.totalorder %v306, 120
        %v481 = vsel %vm479, %v477, 0.0
        %v482 = vsel %vm480, %v478, 0.0
        %v483 = vld [vmem:[#allocation2] sm:$0xff]
        %v484 = vld [vmem:[#allocation2 + $0x8] sm:$0xff]
        %s485 = scalar_lea.vmem %s3, 8
        %v486 = vld [vmem:[%s485] sm:$0xff]
        %488 = vset.pattern.permute.xlu0 0
        %489 = vperm.xlu0 %488, %v486
        %v490 = vpop.permute.xlu0 %489
        %v493 = vsel %vm226, %v484, 0
        %495 = vmatprep.subr.mxu0 %v317
        %496 = vmatpush1.msra.mxu0 %v316
        %497 = vmatprep.subr.mxu0 %v328
        %498 = vmatpush1.msra.mxu0 %v327
        %499 = vmatprep.subr.mxu0 %v339
        %500 = vmatpush1.msra.mxu0 %v338
        %501 = vmatprep.subr.mxu0 %v350
        %502 = vmatpush1.msra.mxu0 %v349
        %503 = vmatprep.subr.mxu0 %v361
        %504 = vmatpush1.msra.mxu0 %v360
        %505 = vmatprep.subr.mxu0 %v372
        %506 = vmatpush1.msra.mxu0 %v371
        %507 = vmatprep.subr.mxu0 %v383
        %508 = vmatpush1.msra.mxu0 %v382
        %509 = vmatprep.subr.mxu0 %v394
        %510 = vmatpush1.msra.mxu0 %v393
        %511 = vmatprep.subr.mxu0 %v279
        %512 = vmatpush1.msra.mxu0 %v278
        %513 = vmatprep.subr.mxu0 %v405
        %514 = vmatpush1.msra.mxu0 %v404
        %515 = vmatprep.subr.mxu0 %v416
        %516 = vmatpush1.msra.mxu0 %v415
        %517 = vmatprep.subr.mxu0 %v427
        %518 = vmatpush1.msra.mxu0 %v426
        %519 = vmatprep.subr.mxu0 %v438
        %520 = vmatpush1.msra.mxu0 %v437
        %521 = vmatprep.subr.mxu0 %v449
        %522 = vmatpush1.msra.mxu0 %v448
        %523 = vmatprep.subr.mxu0 %v460
        %524 = vmatpush1.msra.mxu0 %v459
        %525 = vmatprep.subr.mxu0 %v471
        %526 = vmatpush1.msra.mxu0 %v470
        %527 = vmatprep.subr.mxu0 %v482
        %528 = vmatpush1.msra.mxu0 %v481
        %529 = vmatprep.subr.mxu0 0.0
        %530 = vmatpush1.msra.mxu0 0.0
        %531 = vmatprep.subr.mxu0 0.0
        %532 = vmatpush1.msra.mxu0 0.0
        %533 = vmatprep.subr.mxu0 0.0
        %534 = vmatpush1.msra.mxu0 0.0
        %535 = vmatprep.subr.mxu0 0.0
        %536 = vmatpush1.msra.mxu0 0.0
        %537 = vmatprep.subr.mxu0 0.0
        %538 = vmatpush1.msra.mxu0 0.0
        %539 = vmatprep.subr.mxu0 0.0
        %540 = vmatpush1.msra.mxu0 0.0
        %541 = vmatprep.subr.mxu0 0.0
        %542 = vmatpush1.msra.mxu0 0.0
        %543 = vmatprep.subr.mxu0 0.0
        %544 = vmatpush1.msra.mxu0 0.0
        %545 = vmatprep.subr.mxu0 0.0
        %546 = vmatpush1.msra.mxu0 0.0
        %547 = vmatprep.subr.mxu0 0.0
        %548 = vmatpush1.msra.mxu0 0.0
        %549 = vmatprep.subr.mxu0 0.0
        %550 = vmatpush1.msra.mxu0 0.0
        %551 = vmatprep.subr.mxu0 0.0
        %552 = vmatpush1.msra.mxu0 0.0
        %553 = vmatprep.subr.mxu0 0.0
        %554 = vmatpush1.msra.mxu0 0.0
        %555 = vmatprep.subr.mxu0 0.0
        %556 = vmatpush1.msra.mxu0 0.0
        %557 = vmatprep.subr.mxu0 0.0
        %558 = vmatpush1.msra.mxu0 0.0
        %559 = vmatprep.mubr.f32.mxu0 %v493
        %560 = vmatmul.mubr.f32.gmra.mrb[0].mxu0 %v483
        %v561 = vpop.f32.mrb[0].mxu0
        %v562 = vadd.f32 %v490, %v561
        %v563 = vpop.f32.mrb[0].mxu0
        %v564 = vadd.f32 %v490, %v563
        %565 = vdwg.mxu0
        %v566 = vunpack.c.l.bf16 %v213
        %v567 = vunpack.c.h.bf16 %v213
        %v568 = vadd.f32 %v562, %v566
        %v569 = vadd.f32 %v564, %v567
        %v570 = vmax.f32 %v568, 0.0
        %v571 = vmax.f32 %v569, 0.0
        %572 = vst [vmem:[%s204] sm:$0xff] %v570
        %573 = vst [vmem:[%s204 + $0x8] sm:$0xff] %v571
        %s574 = sand.u32 %s116, 1
        %s575 = scalar_lea.sflag [#allocation4], %s574
        %s576 = sand.u32 %s116, 1
        %s577 = smul.addr %s576, 16
        %s578 = scalar_lea.vmem [#allocation5], %s577
        // Predicated region
        $region41: #{tpu_custom_call.1} parent=35 // pred_check
          %p579 = pneg %p126
        $region42: #{tpu_custom_call.1} parent=35 // pred_check_branch
          %581 = sbr.rel (%p579) target = $region44
        $region43: #{tpu_custom_call.1} parent=35 // pred_region
          %s582 = smul.u32 2, %s19
          %s584 = ssub.s32 256, 256
          %585 = vsyncadd %s575, %s584
          %s586 = smul.addr %s582, 128
          %s587 = scalar_lea.hbm %s4, %s586
          %s589 = sshll.u32 %s578, 4
          %s590 = int_to_ptr.vmem [resolvable:$true] %s589
          %592 = dma.vmem_to_hbm [thread:$0]  %s590, 256, %s587, %s575
        $region44: #{tpu_custom_call.1} parent=35 // pred_fallthru
          _
      $region36: #{tpu_custom_call.1} parent=5 // pred_fallthru
        _
      %p593 = scmp.le.s32.totalorder 2, %s14
      // Predicated region
      $region45: #{tpu_custom_call.1} parent=5 // pred_check
        %p594 = pneg %p593
      $region46: #{tpu_custom_call.1} parent=5 // pred_check_branch
        %596 = sbr.rel (%p594) target = $region48
      $region47: #{tpu_custom_call.1} parent=5 // pred_region
        %s597 = ssub.s32 %s14, 2
        // Predicated region
        $region49: #{tpu_custom_call.1} parent=47 // pred_check
          %p598 = pneg %p132
        $region50: #{tpu_custom_call.1} parent=47 // pred_check_branch
          %600 = sbr.rel (%p598) target = $region52
        $region51: #{tpu_custom_call.1} parent=47 // pred_region
          %s601 = sand.u32 %s117, 1
          %s602 = scalar_lea.sflag [#allocation4], %s601
          %s603 = sand.u32 %s117, 1
          %s604 = smul.addr %s603, 16
          %s605 = scalar_lea.vmem [#allocation5], %s604
          %606 = dma.done %s602, 256
        $region52: #{tpu_custom_call.1} parent=47 // pred_fallthru
          _
      $region48: #{tpu_custom_call.1} parent=5 // pred_fallthru
        _
    $region6: #{tpu_custom_call.1} parent=1 // loop_footer
      %s18 = sadd.s32 1, %s14
    $region7: #{tpu_custom_call.1} parent=1 // loop_footer_branch
      %13 = sbr.rel target = $region3
    $region8: #{tpu_custom_call.1} parent=1 // loop_exit
      _
    %607 = vsyncpa [#allocation3], 1
    %s608 = scalar_lea.sflag [#allocation3], 1
    %609 = vsyncpa %s608, 1
    %610 = vsyncpa [#allocation4], 1
    %s611 = scalar_lea.sflag [#allocation4], 1
    %612 = vsyncpa %s611, 1

</llo_original>
